<compile_context>
chip_gen: v7x
topology: tpu7x:2x2x1
jax: 0.10.0
libtpu: 0.0.40
codegen_flags: <defaults>
</compile_context>

<pallas_src>
import jax
import jax.numpy as jnp
from jax.experimental import pallas as pl
from jax.experimental.pallas import tpu as pltpu


def _mlp_encoder_kernel(x_ref, w1_ref, b1_ref, w2_ref, b2_ref, w3_ref, b3_ref, out_ref):
    # x_ref  : (1, C_in, L)    activations for one batch element
    # w*_ref : (C_out, C_in)   BN-folded 1x1 conv weights
    # b*_ref : (C_out, 1)      BN-folded biases (broadcast along lanes)
    # out_ref: (1, C_last, L)
    x = x_ref[0]                                                           # (C_in, L)

    h1 = jnp.dot(w1_ref[...], x, preferred_element_type=jnp.float32) + b1_ref[...]
    h1 = jnp.maximum(h1, 0.0)                                              # ReLU

    h2 = jnp.dot(w2_ref[...], h1, preferred_element_type=jnp.float32) + b2_ref[...]
    h2 = jnp.maximum(h2, 0.0)                                              # ReLU

    y = jnp.dot(w3_ref[...], h2, preferred_element_type=jnp.float32) + b3_ref[...]
    out_ref[0] = y.astype(out_ref.dtype)


def mlp_encoder_forward(feat, params, eps=1e-5):
    """Pallas equivalent of MLPEncoder.forward (inference).

    feat: [bs, c, h, w]  ->  returns [bs, hidden_dim_delta, h*w] float32.
    params: (w1, b1, g1, beta1, m1, v1, w2, b2, g2, beta2, m2, v2, w3, b3)
            conv weights (C_out, C_in), conv biases (C_out,), BN gamma/beta/
            running_mean/running_var (C,) for the two hidden layers.
    """
    bs, c, h, w = feat.shape
    L = h * w
    x = feat.reshape(bs, c, L)

    (w1, b1, g1, beta1, m1, v1,
     w2, b2, g2, beta2, m2, v2,
     w3, b3) = params

    # Fold eval-mode BatchNorm1d into the preceding 1x1 conv (scale + shift).
    s1 = g1 / jnp.sqrt(v1 + eps)
    w1f = w1 * s1[:, None]
    b1f = s1 * (b1 - m1) + beta1
    s2 = g2 / jnp.sqrt(v2 + eps)
    w2f = w2 * s2[:, None]
    b2f = s2 * (b2 - m2) + beta2

    c1, c2, c3 = w1.shape[0], w2.shape[0], w3.shape[0]

    out = pl.pallas_call(
        _mlp_encoder_kernel,
        out_shape=jax.ShapeDtypeStruct((bs, c3, L), jnp.float32),
        grid_spec=pltpu.PrefetchScalarGridSpec(
            num_scalar_prefetch=0,
            grid=(bs,),
            in_specs=[
                pl.BlockSpec((1, c, L), lambda b: (b, 0, 0)),   # activations
                pl.BlockSpec((c1, c), lambda b: (0, 0)),        # layer-1 weight
                pl.BlockSpec((c1, 1), lambda b: (0, 0)),        # layer-1 bias
                pl.BlockSpec((c2, c1), lambda b: (0, 0)),       # layer-2 weight
                pl.BlockSpec((c2, 1), lambda b: (0, 0)),        # layer-2 bias
                pl.BlockSpec((c3, c2), lambda b: (0, 0)),       # layer-3 weight
                pl.BlockSpec((c3, 1), lambda b: (0, 0)),        # layer-3 bias
            ],
            out_specs=pl.BlockSpec((1, c3, L), lambda b: (b, 0, 0)),
        ),
        compiler_params=pltpu.CompilerParams(
            dimension_semantics=("parallel",),
        ),
    )(x, w1f, b1f[:, None], w2f, b2f[:, None], w3, b3[:, None])
    return out


def _reference(feat, params, eps=1e-5):
    """Pure-JAX reference mirroring MLPEncoder (1x1 Conv1d + eval BN + ReLU)."""
    bs, c, h, w = feat.shape
    x = feat.reshape(bs, c, h * w)
    (w1, b1, g1, beta1, m1, v1,
     w2, b2, g2, beta2, m2, v2,
     w3, b3) = params

    def conv1x1(z, W, b):
        return jnp.einsum("oc,bcl->bol", W, z) + b[None, :, None]

    def bn_eval(z, g, beta, m, v):
        return ((z - m[None, :, None]) / jnp.sqrt(v + eps)[None, :, None]
                * g[None, :, None] + beta[None, :, None])

    y = jax.nn.relu(bn_eval(conv1x1(x, w1, b1), g1, beta1, m1, v1))
    y = jax.nn.relu(bn_eval(conv1x1(y, w2, b2), g2, beta2, m2, v2))
    y = conv1x1(y, w3, b3)
    return y


if __name__ == "__main__":
    key = jax.random.PRNGKey(0)
    keys = jax.random.split(key, 16)

    # MLPEncoder(feature_dim=4, layers=[32, 64], args.hidden_dim_delta=32)
    feature_dim = 4
    layer_dims = [32, 64]
    hidden_dim_delta = 32
    bs, h, w = 2, 16, 16

    feat = jax.random.normal(keys[0], (bs, feature_dim, h, w), dtype=jnp.float32)

    c0, c1, c2, c3 = feature_dim, layer_dims[0], layer_dims[1], hidden_dim_delta
    w1 = 0.2 * jax.random.normal(keys[1], (c1, c0), jnp.float32)
    b1 = 0.1 * jax.random.normal(keys[2], (c1,), jnp.float32)
    g1 = 1.0 + 0.1 * jax.random.normal(keys[3], (c1,), jnp.float32)
    beta1 = 0.1 * jax.random.normal(keys[4], (c1,), jnp.float32)
    m1 = 0.1 * jax.random.normal(keys[5], (c1,), jnp.float32)
    v1 = jnp.abs(jax.random.normal(keys[6], (c1,), jnp.float32)) + 0.5

    w2 = 0.2 * jax.random.normal(keys[7], (c2, c1), jnp.float32)
    b2 = 0.1 * jax.random.normal(keys[8], (c2,), jnp.float32)
    g2 = 1.0 + 0.1 * jax.random.normal(keys[9], (c2,), jnp.float32)
    beta2 = 0.1 * jax.random.normal(keys[10], (c2,), jnp.float32)
    m2 = 0.1 * jax.random.normal(keys[11], (c2,), jnp.float32)
    v2 = jnp.abs(jax.random.normal(keys[12], (c2,), jnp.float32)) + 0.5

    w3 = 0.2 * jax.random.normal(keys[13], (c3, c2), jnp.float32)
    b3 = jnp.zeros((c3,), jnp.float32)   # nn.init.constant_(encoder[-1].bias, 0.0)

    params = (w1, b1, g1, beta1, m1, v1,
              w2, b2, g2, beta2, m2, v2,
              w3, b3)

    out = mlp_encoder_forward(feat, params)
    out = jax.block_until_ready(out)

    ref = _reference(feat, params)
    assert out.shape == (bs, hidden_dim_delta, h * w)
    assert jnp.allclose(out, ref, atol=1e-4, rtol=1e-4), float(jnp.max(jnp.abs(out - ref)))

    print("KERNEL_OK")
</pallas_src>

<mosaic_0001>
module attributes {stable_mosaic.version = 11 : i64} {
  func.func @_mlp_encoder_kernel(%arg0: i32, %arg1: memref<1x4x256xf32, #tpu.memory_space<vmem>>, %arg2: memref<32x4xf32, #tpu.memory_space<vmem>>, %arg3: memref<32x1xf32, #tpu.memory_space<vmem>>, %arg4: memref<64x32xf32, #tpu.memory_space<vmem>>, %arg5: memref<64x1xf32, #tpu.memory_space<vmem>>, %arg6: memref<32x64xf32, #tpu.memory_space<vmem>>, %arg7: memref<32x1xf32, #tpu.memory_space<vmem>>, %arg8: memref<1x32x256xf32, #tpu.memory_space<vmem>>) attributes {dimension_semantics = [#tpu.dimension_semantics<parallel>], iteration_bounds = array<i64: 2>, scalar_prefetch = 0 : i64, scratch_operands = 0 : i64, tpu.core_type = #tpu.core_type<tc>, window_params = [{transform_indices = @transform_0, window_bounds = array<i64: 1, 4, 256>}, {pipeline_mode = #tpu.pipeline_mode<synchronous>, transform_indices = @transform_1, window_bounds = array<i64: 32, 4>}, {pipeline_mode = #tpu.pipeline_mode<synchronous>, transform_indices = @transform_2, window_bounds = array<i64: 32, 1>}, {pipeline_mode = #tpu.pipeline_mode<synchronous>, transform_indices = @transform_3, window_bounds = array<i64: 64, 32>}, {pipeline_mode = #tpu.pipeline_mode<synchronous>, transform_indices = @transform_4, window_bounds = array<i64: 64, 1>}, {pipeline_mode = #tpu.pipeline_mode<synchronous>, transform_indices = @transform_5, window_bounds = array<i64: 32, 64>}, {pipeline_mode = #tpu.pipeline_mode<synchronous>, transform_indices = @transform_6, window_bounds = array<i64: 32, 1>}, {transform_indices = @transform_7, window_bounds = array<i64: 1, 32, 256>}]} {
    %c0 = arith.constant 0 : index
    %c0_0 = arith.constant 0 : index
    %c0_1 = arith.constant 0 : index
    %0 = vector.load %arg1[%c0, %c0_0, %c0_1] : memref<1x4x256xf32, #tpu.memory_space<vmem>>, vector<1x4x256xf32>
    %1 = vector.shape_cast %0 : vector<1x4x256xf32> to vector<4x256xf32>
    %c0_2 = arith.constant 0 : index
    %c0_3 = arith.constant 0 : index
    %2 = vector.load %arg2[%c0_2, %c0_3] : memref<32x4xf32, #tpu.memory_space<vmem>>, vector<32x4xf32>
    %cst = arith.constant dense<0.000000e+00> : vector<32x256xf32>
    %3 = tpu.matmul %2, %1, %cst {dimension_numbers = #tpu.dot_dimension_numbers<[1], [0], [0], [1], [0, 0, 1, 1], [], []>} : vector<32x4xf32>, vector<4x256xf32>, vector<32x256xf32> -> vector<32x256xf32>
    %c0_4 = arith.constant 0 : index
    %c0_5 = arith.constant 0 : index
    %4 = vector.load %arg3[%c0_4, %c0_5] : memref<32x1xf32, #tpu.memory_space<vmem>>, vector<32x1xf32>
    %5 = vector.broadcast %4 : vector<32x1xf32> to vector<32x256xf32>
    %6 = arith.addf %3, %5 : vector<32x256xf32>
    %cst_6 = arith.constant 0.000000e+00 : f32
    %7 = vector.broadcast %cst_6 : f32 to vector<32x256xf32>
    %8 = arith.maximumf %6, %7 : vector<32x256xf32>
    %c0_7 = arith.constant 0 : index
    %c0_8 = arith.constant 0 : index
    %9 = vector.load %arg4[%c0_7, %c0_8] : memref<64x32xf32, #tpu.memory_space<vmem>>, vector<64x32xf32>
    %cst_9 = arith.constant dense<0.000000e+00> : vector<64x256xf32>
    %10 = tpu.matmul %9, %8, %cst_9 {dimension_numbers = #tpu.dot_dimension_numbers<[1], [0], [0], [1], [0, 0, 1, 1], [], []>} : vector<64x32xf32>, vector<32x256xf32>, vector<64x256xf32> -> vector<64x256xf32>
    %c0_10 = arith.constant 0 : index
    %c0_11 = arith.constant 0 : index
    %11 = vector.load %arg5[%c0_10, %c0_11] : memref<64x1xf32, #tpu.memory_space<vmem>>, vector<64x1xf32>
    %12 = vector.broadcast %11 : vector<64x1xf32> to vector<64x256xf32>
    %13 = arith.addf %10, %12 : vector<64x256xf32>
    %cst_12 = arith.constant 0.000000e+00 : f32
    %14 = vector.broadcast %cst_12 : f32 to vector<64x256xf32>
    %15 = arith.maximumf %13, %14 : vector<64x256xf32>
    %c0_13 = arith.constant 0 : index
    %c0_14 = arith.constant 0 : index
    %16 = vector.load %arg6[%c0_13, %c0_14] : memref<32x64xf32, #tpu.memory_space<vmem>>, vector<32x64xf32>
    %cst_15 = arith.constant dense<0.000000e+00> : vector<32x256xf32>
    %17 = tpu.matmul %16, %15, %cst_15 {dimension_numbers = #tpu.dot_dimension_numbers<[1], [0], [0], [1], [0, 0, 1, 1], [], []>} : vector<32x64xf32>, vector<64x256xf32>, vector<32x256xf32> -> vector<32x256xf32>
    %c0_16 = arith.constant 0 : index
    %c0_17 = arith.constant 0 : index
    %18 = vector.load %arg7[%c0_16, %c0_17] : memref<32x1xf32, #tpu.memory_space<vmem>>, vector<32x1xf32>
    %19 = vector.broadcast %18 : vector<32x1xf32> to vector<32x256xf32>
    %20 = arith.addf %17, %19 : vector<32x256xf32>
    %c0_18 = arith.constant 0 : index
    %c0_19 = arith.constant 0 : index
    %c0_20 = arith.constant 0 : index
    %21 = vector.load %arg8[%c0_18, %c0_19, %c0_20] : memref<1x32x256xf32, #tpu.memory_space<vmem>>, vector<1x32x256xf32>
    %22 = vector.shape_cast %21 : vector<1x32x256xf32> to vector<32x256xf32>
    %23 = vector.shape_cast %20 : vector<32x256xf32> to vector<1x32x256xf32>
    tpu.vector_store %arg8[%c0_18, %c0_19, %c0_20], %23 {strides = array<i32>} : memref<1x32x256xf32, #tpu.memory_space<vmem>>, vector<1x32x256xf32>,
    return
  }
  func.func @transform_0(%arg0: i32) -> (i32, i32, i32) {
    %c0_i32 = arith.constant 0 : i32
    %c0_i32_0 = arith.constant 0 : i32
    %c0_i32_1 = arith.constant 0 : i32
    return %arg0, %c0_i32, %c0_i32_0 : i32, i32, i32
  }
  func.func @transform_1(%arg0: i32) -> (i32, i32) {
    %c0_i32 = arith.constant 0 : i32
    %c0_i32_0 = arith.constant 0 : i32
    %c0_i32_1 = arith.constant 0 : i32
    return %c0_i32, %c0_i32_0 : i32, i32
  }
  func.func @transform_2(%arg0: i32) -> (i32, i32) {
    %c0_i32 = arith.constant 0 : i32
    %c0_i32_0 = arith.constant 0 : i32
    %c0_i32_1 = arith.constant 0 : i32
    return %c0_i32, %c0_i32_0 : i32, i32
  }
  func.func @transform_3(%arg0: i32) -> (i32, i32) {
    %c0_i32 = arith.constant 0 : i32
    %c0_i32_0 = arith.constant 0 : i32
    %c0_i32_1 = arith.constant 0 : i32
    return %c0_i32, %c0_i32_0 : i32, i32
  }
  func.func @transform_4(%arg0: i32) -> (i32, i32) {
    %c0_i32 = arith.constant 0 : i32
    %c0_i32_0 = arith.constant 0 : i32
    %c0_i32_1 = arith.constant 0 : i32
    return %c0_i32, %c0_i32_0 : i32, i32
  }
  func.func @transform_5(%arg0: i32) -> (i32, i32) {
    %c0_i32 = arith.constant 0 : i32
    %c0_i32_0 = arith.constant 0 : i32
    %c0_i32_1 = arith.constant 0 : i32
    return %c0_i32, %c0_i32_0 : i32, i32
  }
  func.func @transform_6(%arg0: i32) -> (i32, i32) {
    %c0_i32 = arith.constant 0 : i32
    %c0_i32_0 = arith.constant 0 : i32
    %c0_i32_1 = arith.constant 0 : i32
    return %c0_i32, %c0_i32_0 : i32, i32
  }
  func.func @transform_7(%arg0: i32) -> (i32, i32, i32) {
    %c0_i32 = arith.constant 0 : i32
    %c0_i32_0 = arith.constant 0 : i32
    %c0_i32_1 = arith.constant 0 : i32
    return %arg0, %c0_i32, %c0_i32_0 : i32, i32, i32
  }
}

</mosaic_0001>

<llo_original>
// kernel: tpu_custom_call.1
$region0: #{tpu_custom_call.1}
  #allocation0 [shape = 'u32[]', space=smem, size = 0x4, offset = 0x4, fixed_abs, tag = 'smem constant byte address 0x4 - core index']
  #allocation1 [shape = 'u32[144,128]{1,0:T(1,128)}', space=vmem, size = 0x12000, scoped, tag = 'internal scratch']
  %s0 = inlined_call_operand.vmem [shape: f32[2,4,256], index: 0, kind: input, shape index: {}]
  %s1 = inlined_call_operand.vmem [shape: f32[32,4], index: 1, kind: input, shape index: {}]
  %s2 = inlined_call_operand.vmem [shape: f32[32,1], index: 2, kind: input, shape index: {}]
  %s3 = inlined_call_operand.vmem [shape: f32[64,32], index: 3, kind: input, shape index: {}]
  %s4 = inlined_call_operand.vmem [shape: f32[64,1], index: 4, kind: input, shape index: {}]
  %s5 = inlined_call_operand.vmem [shape: f32[32,64], index: 5, kind: input, shape index: {}]
  %s6 = inlined_call_operand.vmem [shape: f32[32,1], index: 6, kind: input, shape index: {}]
  %s7 = inlined_call_operand.hbm [shape: f32[2,32,256], index: 7, kind: output, shape index: {}]
  %s8 = sld [smem:[#allocation0]]
  $region61: #{tpu_custom_call.1} parent=0
    _
  %s10 = ssub.s32 1, %s8
  %s11 = scalar_select 0, %s10, %s8
  $region1: #{tpu_custom_call.1} parent=0
    #allocation2 [shape = 'u8[65536]{0}', space=vmem, size = 0x10000, scoped, tag = 'output window, operand 0']
    #allocation3 [shape = 's32[2]{0}', space=sflag, size = 0x8, scoped, tag = 'scoped memory for tpu_custom_call.1']
    %12 = vsyncpa [#allocation3], 0
    %s13 = scalar_lea.sflag [#allocation3], 1
    %14 = vsyncpa %s13, 0
    loop: start=0, step=1, limit=4
    $region2: #{tpu_custom_call.1} parent=1 // loop_pre_header
      _
    $region3: #{tpu_custom_call.1} parent=1 // loop_header
      %s16 = sphi 0, %s20
      %p17 = scmp.ge.s32.totalorder %s16, 4
      %s26 = sphi 0, %s28
      %s29 = sphi 0, %s26
      %s30 = sphi 0, %s29
      %s46 = sphi 0, %s30
      %s50 = sphi 0, %s50
      %s52 = sphi 0, %s50
      %s53 = sphi 0, %s52
      %s67 = sphi 0, %s53
      %s71 = sphi 0, %s71
      %s73 = sphi 0, %s71
      %s74 = sphi 0, %s73
      %s88 = sphi 0, %s74
      %s92 = sphi 0, %s92
      %s94 = sphi 0, %s92
      %s95 = sphi 0, %s94
      %s109 = sphi 0, %s95
      %s113 = sphi 0, %s113
      %s115 = sphi 0, %s113
      %s116 = sphi 0, %s115
      %s130 = sphi 0, %s116
      %s134 = sphi 0, %s134
      %s136 = sphi 0, %s134
      %s137 = sphi 0, %s136
      %s151 = sphi 0, %s137
      %s155 = sphi 0, %s155
      %s157 = sphi 0, %s155
      %s158 = sphi 0, %s157
      %s172 = sphi 0, %s158
      %s178 = sphi 0, %s180
      %s181 = sphi 0, %s178
      %s182 = sphi 0, %s181
      %s198 = sphi 0, %s182
    $region4: #{tpu_custom_call.1} parent=1 // loop_header_branch
      %19 = sbr.rel (%p17) target = $region8
    $region5: #{tpu_custom_call.1} parent=1 // loop_body
      %s21 = ssub.s32 %s16, 1
      %s22 = ssub.s32 %s16, 2
      %s23 = sadd.s32 %s16, 1
      %s24 = ssub.s32 %s16, %s23
      %p25 = scmp.eq.s32.totalorder %s24, 0
      %s27 = sadd.s32 %s26, 1
      %s28 = scalar_select %p25, %s26, %s27
      %p31 = pneg %p25
      %p32 = scmp.eq.s32.totalorder %s16, 1
      %p33 = por %p31, %p32
      %p34 = scmp.ne.s32.totalorder %s26, %s29
      %p35 = scmp.eq.s32.totalorder %s16, 0
      %p36 = por %p34, %p35
      %p37 = scmp.ne.s32.totalorder %s26, %s29
      %p38 = scmp.eq.s32.totalorder %s21, 1
      %p39 = por %p37, %p38
      %p40 = scmp.ne.s32.totalorder %s29, %s30
      %p41 = scmp.eq.s32.totalorder %s21, 0
      %p42 = por %p40, %p41
      %p43 = scmp.ne.s32.totalorder %s29, %s30
      %p44 = scmp.eq.s32.totalorder %s22, 1
      %p45 = por %p43, %p44
      %p47 = scmp.ne.s32.totalorder %s30, %s46
      %p48 = scmp.eq.s32.totalorder %s22, 0
      %p49 = por %p47, %p48
      %s51 = sadd.s32 %s50, 1
      %p54 = scmp.eq.s32.totalorder %s16, 1
      %p55 = scmp.ne.s32.totalorder %s50, %s52
      %p56 = scmp.eq.s32.totalorder %s16, 0
      %p57 = por %p55, %p56
      %p58 = scmp.ne.s32.totalorder %s50, %s52
      %p59 = scmp.eq.s32.totalorder %s21, 1
      %p60 = por %p58, %p59
      %p61 = scmp.ne.s32.totalorder %s52, %s53
      %p62 = scmp.eq.s32.totalorder %s21, 0
      %p63 = por %p61, %p62
      %p64 = scmp.ne.s32.totalorder %s52, %s53
      %p65 = scmp.eq.s32.totalorder %s22, 1
      %p66 = por %p64, %p65
      %p68 = scmp.ne.s32.totalorder %s53, %s67
      %p69 = scmp.eq.s32.totalorder %s22, 0
      %p70 = por %p68, %p69
      %s72 = sadd.s32 %s71, 1
      %p75 = scmp.eq.s32.totalorder %s16, 1
      %p76 = scmp.ne.s32.totalorder %s71, %s73
      %p77 = scmp.eq.s32.totalorder %s16, 0
      %p78 = por %p76, %p77
      %p79 = scmp.ne.s32.totalorder %s71, %s73
      %p80 = scmp.eq.s32.totalorder %s21, 1
      %p81 = por %p79, %p80
      %p82 = scmp.ne.s32.totalorder %s73, %s74
      %p83 = scmp.eq.s32.totalorder %s21, 0
      %p84 = por %p82, %p83
      %p85 = scmp.ne.s32.totalorder %s73, %s74
      %p86 = scmp.eq.s32.totalorder %s22, 1
      %p87 = por %p85, %p86
      %p89 = scmp.ne.s32.totalorder %s74, %s88
      %p90 = scmp.eq.s32.totalorder %s22, 0
      %p91 = por %p89, %p90
      %s93 = sadd.s32 %s92, 1
      %p96 = scmp.eq.s32.totalorder %s16, 1
      %p97 = scmp.ne.s32.totalorder %s92, %s94
      %p98 = scmp.eq.s32.totalorder %s16, 0
      %p99 = por %p97, %p98
      %p100 = scmp.ne.s32.totalorder %s92, %s94
      %p101 = scmp.eq.s32.totalorder %s21, 1
      %p102 = por %p100, %p101
      %p103 = scmp.ne.s32.totalorder %s94, %s95
      %p104 = scmp.eq.s32.totalorder %s21, 0
      %p105 = por %p103, %p104
      %p106 = scmp.ne.s32.totalorder %s94, %s95
      %p107 = scmp.eq.s32.totalorder %s22, 1
      %p108 = por %p106, %p107
      %p110 = scmp.ne.s32.totalorder %s95, %s109
      %p111 = scmp.eq.s32.totalorder %s22, 0
      %p112 = por %p110, %p111
      %s114 = sadd.s32 %s113, 1
      %p117 = scmp.eq.s32.totalorder %s16, 1
      %p118 = scmp.ne.s32.totalorder %s113, %s115
      %p119 = scmp.eq.s32.totalorder %s16, 0
      %p120 = por %p118, %p119
      %p121 = scmp.ne.s32.totalorder %s113, %s115
      %p122 = scmp.eq.s32.totalorder %s21, 1
      %p123 = por %p121, %p122
      %p124 = scmp.ne.s32.totalorder %s115, %s116
      %p125 = scmp.eq.s32.totalorder %s21, 0
      %p126 = por %p124, %p125
      %p127 = scmp.ne.s32.totalorder %s115, %s116
      %p128 = scmp.eq.s32.totalorder %s22, 1
      %p129 = por %p127, %p128
      %p131 = scmp.ne.s32.totalorder %s116, %s130
      %p132 = scmp.eq.s32.totalorder %s22, 0
      %p133 = por %p131, %p132
      %s135 = sadd.s32 %s134, 1
      %p138 = scmp.eq.s32.totalorder %s16, 1
      %p139 = scmp.ne.s32.totalorder %s134, %s136
      %p140 = scmp.eq.s32.totalorder %s16, 0
      %p141 = por %p139, %p140
      %p142 = scmp.ne.s32.totalorder %s134, %s136
      %p143 = scmp.eq.s32.totalorder %s21, 1
      %p144 = por %p142, %p143
      %p145 = scmp.ne.s32.totalorder %s136, %s137
      %p146 = scmp.eq.s32.totalorder %s21, 0
      %p147 = por %p145, %p146
      %p148 = scmp.ne.s32.totalorder %s136, %s137
      %p149 = scmp.eq.s32.totalorder %s22, 1
      %p150 = por %p148, %p149
      %p152 = scmp.ne.s32.totalorder %s137, %s151
      %p153 = scmp.eq.s32.totalorder %s22, 0
      %p154 = por %p152, %p153
      %s156 = sadd.s32 %s155, 1
      %p159 = scmp.eq.s32.totalorder %s16, 1
      %p160 = scmp.ne.s32.totalorder %s155, %s157
      %p161 = scmp.eq.s32.totalorder %s16, 0
      %p162 = por %p160, %p161
      %p163 = scmp.ne.s32.totalorder %s155, %s157
      %p164 = scmp.eq.s32.totalorder %s21, 1
      %p165 = por %p163, %p164
      %p166 = scmp.ne.s32.totalorder %s157, %s158
      %p167 = scmp.eq.s32.totalorder %s21, 0
      %p168 = por %p166, %p167
      %p169 = scmp.ne.s32.totalorder %s157, %s158
      %p170 = scmp.eq.s32.totalorder %s22, 1
      %p171 = por %p169, %p170
      %p173 = scmp.ne.s32.totalorder %s158, %s172
      %p174 = scmp.eq.s32.totalorder %s22, 0
      %p175 = por %p173, %p174
      %s176 = ssub.s32 %s16, %s23
      %p177 = scmp.eq.s32.totalorder %s176, 0
      %s179 = sadd.s32 %s178, 1
      %s180 = scalar_select %p177, %s178, %s179
      %p183 = pneg %p177
      %p184 = scmp.eq.s32.totalorder %s16, 1
      %p185 = por %p183, %p184
      %p186 = scmp.ne.s32.totalorder %s178, %s181
      %p187 = scmp.eq.s32.totalorder %s16, 0
      %p188 = por %p186, %p187
      %p189 = scmp.ne.s32.totalorder %s178, %s181
      %p190 = scmp.eq.s32.totalorder %s21, 1
      %p191 = por %p189, %p190
      %p192 = scmp.ne.s32.totalorder %s181, %s182
      %p193 = scmp.eq.s32.totalorder %s21, 0
      %p194 = por %p192, %p193
      %p195 = scmp.ne.s32.totalorder %s181, %s182
      %p196 = scmp.eq.s32.totalorder %s22, 1
      %p197 = por %p195, %p196
      %p199 = scmp.ne.s32.totalorder %s182, %s198
      %p200 = scmp.eq.s32.totalorder %s22, 0
      %p201 = por %p199, %p200
      %p202 = scmp.le.s32.totalorder 1, %s16
      %p203 = scmp.lt.s32.totalorder %s16, 3
      %p204 = pnand %p202, %p203
      %p205 = pneg %p204
      // Predicated region
      $region9: #{tpu_custom_call.1} parent=5 // pred_check
        _
      $region10: #{tpu_custom_call.1} parent=5 // pred_check_branch
        %207 = sbr.rel (%p204) target = $region12
      $region11: #{tpu_custom_call.1} parent=5 // pred_region
        %s208 = ssub.s32 %s16, 1
        // Predicated region
        $region13: #{tpu_custom_call.1} parent=11 // pred_check
          %p209 = pneg %p63
        $region14: #{tpu_custom_call.1} parent=11 // pred_check_branch
          %211 = sbr.rel (%p209) target = $region16
        $region15: #{tpu_custom_call.1} parent=11 // pred_region
          _
        $region16: #{tpu_custom_call.1} parent=11 // pred_fallthru
          _
        // Predicated region
        $region17: #{tpu_custom_call.1} parent=11 // pred_check
          %p212 = pneg %p84
        $region18: #{tpu_custom_call.1} parent=11 // pred_check_branch
          %214 = sbr.rel (%p212) target = $region20
        $region19: #{tpu_custom_call.1} parent=11 // pred_region
          _
        $region20: #{tpu_custom_call.1} parent=11 // pred_fallthru
          _
        // Predicated region
        $region21: #{tpu_custom_call.1} parent=11 // pred_check
          %p215 = pneg %p105
        $region22: #{tpu_custom_call.1} parent=11 // pred_check_branch
          %217 = sbr.rel (%p215) target = $region24
        $region23: #{tpu_custom_call.1} parent=11 // pred_region
          _
        $region24: #{tpu_custom_call.1} parent=11 // pred_fallthru
          _
        // Predicated region
        $region25: #{tpu_custom_call.1} parent=11 // pred_check
          %p218 = pneg %p126
        $region26: #{tpu_custom_call.1} parent=11 // pred_check_branch
          %220 = sbr.rel (%p218) target = $region28
        $region27: #{tpu_custom_call.1} parent=11 // pred_region
          _
        $region28: #{tpu_custom_call.1} parent=11 // pred_fallthru
          _
        // Predicated region
        $region29: #{tpu_custom_call.1} parent=11 // pred_check
          %p221 = pneg %p147
        $region30: #{tpu_custom_call.1} parent=11 // pred_check_branch
          %223 = sbr.rel (%p221) target = $region32
        $region31: #{tpu_custom_call.1} parent=11 // pred_region
          _
        $region32: #{tpu_custom_call.1} parent=11 // pred_fallthru
          _
        // Predicated region
        $region33: #{tpu_custom_call.1} parent=11 // pred_check
          %p224 = pneg %p168
        $region34: #{tpu_custom_call.1} parent=11 // pred_check_branch
          %226 = sbr.rel (%p224) target = $region36
        $region35: #{tpu_custom_call.1} parent=11 // pred_region
          _
        $region36: #{tpu_custom_call.1} parent=11 // pred_fallthru
          _
      $region12: #{tpu_custom_call.1} parent=5 // pred_fallthru
        _
      %p227 = scmp.lt.s32.totalorder %s16, 2
      // Predicated region
      $region37: #{tpu_custom_call.1} parent=5 // pred_check
        %p228 = pneg %p227
      $region38: #{tpu_custom_call.1} parent=5 // pred_check_branch
        %230 = sbr.rel (%p228) target = $region40
      $region39: #{tpu_custom_call.1} parent=5 // pred_region
        // Predicated region
        $region41: #{tpu_custom_call.1} parent=39 // pred_check
          %p231 = pneg %p36
        $region42: #{tpu_custom_call.1} parent=39 // pred_check_branch
          %233 = sbr.rel (%p231) target = $region44
        $region43: #{tpu_custom_call.1} parent=39 // pred_region
          %p234 = scmp.lt.s32.totalorder %s16, 1
          %s235 = scalar_select %p234, %s16, 1
          %s236 = smul.addr %s235, 2
          %s237 = smul.addr %s236, 4
          %s238 = scalar_lea.vmem %s0, %s237
        $region44: #{tpu_custom_call.1} parent=39 // pred_fallthru
          _
      $region40: #{tpu_custom_call.1} parent=5 // pred_fallthru
        _
      %p239 = scmp.le.s32.totalorder 1, %s16
      %p240 = scmp.lt.s32.totalorder %s16, 3
      %p241 = pnand %p239, %p240
      %p242 = pneg %p241
      // Predicated region
      $region45: #{tpu_custom_call.1} parent=5 // pred_check
        _
      $region46: #{tpu_custom_call.1} parent=5 // pred_check_branch
        %244 = sbr.rel (%p241) target = $region48
      $region47: #{tpu_custom_call.1} parent=5 // pred_region
        %s245 = ssub.s32 %s16, 1
        %p246 = scmp.lt.s32.totalorder %s21, 1
        %s247 = scalar_select %p246, %s21, 1
        %s248 = smul.addr %s247, 2
        %s249 = smul.addr %s248, 4
        %s250 = scalar_lea.vmem %s0, %s249
        %p251 = pneg %p42
        %p252 = pneg %p39
        %p253 = pneg %p63
        %p254 = pneg %p60
        %p255 = pneg %p84
        %p256 = pneg %p81
        %p257 = pneg %p105
        %p258 = pneg %p102
        %p259 = pneg %p126
        %p260 = pneg %p123
        %p261 = pneg %p147
        %p262 = pneg %p144
        %p263 = pneg %p168
        %p264 = pneg %p165
        %p265 = pneg %p194
        %p266 = pneg %p191
        %s267 = sand.u32 %s181, 1
        %s268 = scalar_lea.sflag [#allocation3], %s267
        %s269 = sand.u32 %s181, 1
        %s270 = smul.addr %s269, 64
        %s271 = scalar_lea.vmem [#allocation2], %s270
        %p272 = scmp.lt.s32.totalorder %s21, 1
        %s273 = scalar_select %p272, %s21, 1
        %s274 = smul.addr %s273, 2
        %s275 = smul.addr %s274, 4
        %s276 = scalar_lea.vmem %s0, %s275
        %v277 = vld [vmem:[%s276] sm:$0xff]
        %v278 = vld [vmem:[%s1] sm:$0xff]
        %v279 = vld [vmem:[%s1 + $0x8] sm:$0xff]
        %v280 = vld [vmem:[%s1 + $0x10] sm:$0xff]
        %v281 = vld [vmem:[%s1 + $0x18] sm:$0xff]
        %v282 = vld [vmem:[%s2] sm:$0xff]
        %v283 = vld [vmem:[%s2 + $0x8] sm:$0xff]
        %v284 = vld [vmem:[%s2 + $0x10] sm:$0xff]
        %v285 = vld [vmem:[%s2 + $0x18] sm:$0xff]
        %287 = vset.pattern.permute.xlu0 0
        %288 = vperm.xlu0 %287, %v282
        %v289 = vpop.permute.xlu0 %288
        %292 = vset.pattern.permute.xlu0 0
        %293 = vperm.xlu0 %292, %v283
        %v294 = vpop.permute.xlu0 %293
        %297 = vset.pattern.permute.xlu0 0
        %298 = vperm.xlu0 %297, %v284
        %v299 = vpop.permute.xlu0 %298
        %302 = vset.pattern.permute.xlu0 0
        %303 = vperm.xlu0 %302, %v285
        %v304 = vpop.permute.xlu0 %303
        %v307 = vcombine.high %v277, %v277
        %vm308 = vcmask 31744
        %v310 = vsel %vm308, %v278, 0
        %v313 = vsel %vm308, %v279, 0
        %v316 = vsel %vm308, %v280, 0
        %v319 = vsel %vm308, %v281, 0
        %vm321 = vcmask 1043456
        %v322 = vsel %vm321, %v277, 0
        %v324 = vsel %vm321, %v307, 0
        %326 = vmatprep.subr.mxu0 %v324
        %327 = vmatpush1.msra.mxu0 %v322
        %328 = vmatprep.subr.mxu0 0.0
        %329 = vmatpush1.msra.mxu0 0.0
        %330 = vmatprep.subr.mxu0 0.0
        %331 = vmatpush1.msra.mxu0 0.0
        %332 = vmatprep.subr.mxu0 0.0
        %333 = vmatpush1.msra.mxu0 0.0
        %334 = vmatprep.subr.mxu0 0.0
        %335 = vmatpush1.msra.mxu0 0.0
        %336 = vmatprep.subr.mxu0 0.0
        %337 = vmatpush1.msra.mxu0 0.0
        %338 = vmatprep.subr.mxu0 0.0
        %339 = vmatpush1.msra.mxu0 0.0
        %340 = vmatprep.subr.mxu0 0.0
        %341 = vmatpush1.msra.mxu0 0.0
        %342 = vmatprep.subr.mxu0 0.0
        %343 = vmatpush1.msra.mxu0 0.0
        %344 = vmatprep.subr.mxu0 0.0
        %345 = vmatpush1.msra.mxu0 0.0
        %346 = vmatprep.subr.mxu0 0.0
        %347 = vmatpush1.msra.mxu0 0.0
        %348 = vmatprep.subr.mxu0 0.0
        %349 = vmatpush1.msra.mxu0 0.0
        %350 = vmatprep.subr.mxu0 0.0
        %351 = vmatpush1.msra.mxu0 0.0
        %352 = vmatprep.subr.mxu0 0.0
        %353 = vmatpush1.msra.mxu0 0.0
        %354 = vmatprep.subr.mxu0 0.0
        %355 = vmatpush1.msra.mxu0 0.0
        %356 = vmatprep.subr.mxu0 0.0
        %357 = vmatpush1.msra.mxu0 0.0
        %358 = vmatprep.subr.mxu0 0.0
        %359 = vmatpush1.msra.mxu0 0.0
        %360 = vmatprep.subr.mxu0 0.0
        %361 = vmatpush1.msra.mxu0 0.0
        %362 = vmatprep.subr.mxu0 0.0
        %363 = vmatpush1.msra.mxu0 0.0
        %364 = vmatprep.subr.mxu0 0.0
        %365 = vmatpush1.msra.mxu0 0.0
        %366 = vmatprep.subr.mxu0 0.0
        %367 = vmatpush1.msra.mxu0 0.0
        %368 = vmatprep.subr.mxu0 0.0
        %369 = vmatpush1.msra.mxu0 0.0
        %370 = vmatprep.subr.mxu0 0.0
        %371 = vmatpush1.msra.mxu0 0.0
        %372 = vmatprep.subr.mxu0 0.0
        %373 = vmatpush1.msra.mxu0 0.0
        %374 = vmatprep.subr.mxu0 0.0
        %375 = vmatpush1.msra.mxu0 0.0
        %376 = vmatprep.subr.mxu0 0.0
        %377 = vmatpush1.msra.mxu0 0.0
        %378 = vmatprep.subr.mxu0 0.0
        %379 = vmatpush1.msra.mxu0 0.0
        %380 = vmatprep.subr.mxu0 0.0
        %381 = vmatpush1.msra.mxu0 0.0
        %382 = vmatprep.subr.mxu0 0.0
        %383 = vmatpush1.msra.mxu0 0.0
        %384 = vmatprep.subr.mxu0 0.0
        %385 = vmatpush1.msra.mxu0 0.0
        %386 = vmatprep.subr.mxu0 0.0
        %387 = vmatpush1.msra.mxu0 0.0
        %388 = vmatprep.subr.mxu0 0.0
        %389 = vmatpush1.msra.mxu0 0.0
        %390 = vmatprep.mubr.f32.mxu0 0.0
        %391 = vmatmul.mubr.f32.gmra.mrb[0].mxu0 %v310
        %v392 = vpop.f32.mrb[0].mxu0
        %v393 = vadd.f32 %v289, %v392
        %v394 = vpop.f32.mrb[0].mxu0
        %v395 = vadd.f32 %v289, %v394
        %396 = vmatprep.mubr.f32.mxu0 0.0
        %397 = vmatmul.mubr.f32.gmra.mrb[0].mxu0 %v313
        %v398 = vpop.f32.mrb[0].mxu0
        %v399 = vadd.f32 %v294, %v398
        %v400 = vpop.f32.mrb[0].mxu0
        %v401 = vadd.f32 %v294, %v400
        %402 = vmatprep.mubr.f32.mxu0 0.0
        %403 = vmatmul.mubr.f32.gmra.mrb[0].mxu0 %v316
        %v404 = vpop.f32.mrb[0].mxu0
        %v405 = vadd.f32 %v299, %v404
        %v406 = vpop.f32.mrb[0].mxu0
        %v407 = vadd.f32 %v299, %v406
        %408 = vmatprep.mubr.f32.mxu0 0.0
        %409 = vmatmul.mubr.f32.gmra.mrb[0].mxu0 %v319
        %v410 = vpop.f32.mrb[0].mxu0
        %v411 = vadd.f32 %v304, %v410
        %v412 = vpop.f32.mrb[0].mxu0
        %v413 = vadd.f32 %v304, %v412
        %414 = vdwg.mxu0
        %v415 = vmax.f32 %v393, 0.0
        %v416 = vmax.f32 %v395, 0.0
        %v417 = vmax.f32 %v399, 0.0
        %v418 = vmax.f32 %v401, 0.0
        %v419 = vmax.f32 %v405, 0.0
        %v420 = vmax.f32 %v407, 0.0
        %v421 = vmax.f32 %v411, 0.0
        %v422 = vmax.f32 %v413, 0.0
        %v423 = vld [vmem:[%s3] sm:$0xff]
        %v424 = vld [vmem:[%s3 + $0x8] sm:$0xff]
        %v425 = vld [vmem:[%s3 + $0x10] sm:$0xff]
        %v426 = vld [vmem:[%s3 + $0x18] sm:$0xff]
        %v427 = vld [vmem:[%s3 + $0x20] sm:$0xff]
        %v428 = vld [vmem:[%s3 + $0x28] sm:$0xff]
        %v429 = vld [vmem:[%s3 + $0x30] sm:$0xff]
        %v430 = vld [vmem:[%s3 + $0x38] sm:$0xff]
        %v431 = vld [vmem:[%s4] sm:$0xff]
        %v432 = vld [vmem:[%s4 + $0x8] sm:$0xff]
        %v433 = vld [vmem:[%s4 + $0x10] sm:$0xff]
        %v434 = vld [vmem:[%s4 + $0x18] sm:$0xff]
        %v435 = vld [vmem:[%s4 + $0x20] sm:$0xff]
        %v436 = vld [vmem:[%s4 + $0x28] sm:$0xff]
        %v437 = vld [vmem:[%s4 + $0x30] sm:$0xff]
        %v438 = vld [vmem:[%s4 + $0x38] sm:$0xff]
        %440 = vset.pattern.permute.xlu0 0
        %441 = vperm.xlu0 %440, %v431
        %v442 = vpop.permute.xlu0 %441
        %445 = vset.pattern.permute.xlu0 0
        %446 = vperm.xlu0 %445, %v432
        %v447 = vpop.permute.xlu0 %446
        %450 = vset.pattern.permute.xlu0 0
        %451 = vperm.xlu0 %450, %v433
        %v452 = vpop.permute.xlu0 %451
        %455 = vset.pattern.permute.xlu0 0
        %456 = vperm.xlu0 %455, %v434
        %v457 = vpop.permute.xlu0 %456
        %460 = vset.pattern.permute.xlu0 0
        %461 = vperm.xlu0 %460, %v435
        %v462 = vpop.permute.xlu0 %461
        %465 = vset.pattern.permute.xlu0 0
        %466 = vperm.xlu0 %465, %v436
        %v467 = vpop.permute.xlu0 %466
        %470 = vset.pattern.permute.xlu0 0
        %471 = vperm.xlu0 %470, %v437
        %v472 = vpop.permute.xlu0 %471
        %475 = vset.pattern.permute.xlu0 0
        %476 = vperm.xlu0 %475, %v438
        %v477 = vpop.permute.xlu0 %476
        %vm479 = vcmask 261120
        %v481 = vsel %vm479, %v423, 0
        %v484 = vsel %vm479, %v424, 0
        %v487 = vsel %vm479, %v425, 0
        %v490 = vsel %vm479, %v426, 0
        %v493 = vsel %vm479, %v427, 0
        %v496 = vsel %vm479, %v428, 0
        %v499 = vsel %vm479, %v429, 0
        %v502 = vsel %vm479, %v430, 0
        %504 = vmatprep.subr.mxu0 %v416
        %505 = vmatpush1.msra.mxu0 %v415
        %506 = vmatprep.subr.mxu0 %v418
        %507 = vmatpush1.msra.mxu0 %v417
        %508 = vmatprep.subr.mxu0 %v420
        %509 = vmatpush1.msra.mxu0 %v419
        %510 = vmatprep.subr.mxu0 %v422
        %511 = vmatpush1.msra.mxu0 %v421
        %512 = vmatprep.subr.mxu0 0.0
        %513 = vmatpush1.msra.mxu0 0.0
        %514 = vmatprep.subr.mxu0 0.0
        %515 = vmatpush1.msra.mxu0 0.0
        %516 = vmatprep.subr.mxu0 0.0
        %517 = vmatpush1.msra.mxu0 0.0
        %518 = vmatprep.subr.mxu0 0.0
        %519 = vmatpush1.msra.mxu0 0.0
        %520 = vmatprep.subr.mxu0 0.0
        %521 = vmatpush1.msra.mxu0 0.0
        %522 = vmatprep.subr.mxu0 0.0
        %523 = vmatpush1.msra.mxu0 0.0
        %524 = vmatprep.subr.mxu0 0.0
        %525 = vmatpush1.msra.mxu0 0.0
        %526 = vmatprep.subr.mxu0 0.0
        %527 = vmatpush1.msra.mxu0 0.0
        %528 = vmatprep.subr.mxu0 0.0
        %529 = vmatpush1.msra.mxu0 0.0
        %530 = vmatprep.subr.mxu0 0.0
        %531 = vmatpush1.msra.mxu0 0.0
        %532 = vmatprep.subr.mxu0 0.0
        %533 = vmatpush1.msra.mxu0 0.0
        %534 = vmatprep.subr.mxu0 0.0
        %535 = vmatpush1.msra.mxu0 0.0
        %536 = vmatprep.subr.mxu0 0.0
        %537 = vmatpush1.msra.mxu0 0.0
        %538 = vmatprep.subr.mxu0 0.0
        %539 = vmatpush1.msra.mxu0 0.0
        %540 = vmatprep.subr.mxu0 0.0
        %541 = vmatpush1.msra.mxu0 0.0
        %542 = vmatprep.subr.mxu0 0.0
        %543 = vmatpush1.msra.mxu0 0.0
        %544 = vmatprep.subr.mxu0 0.0
        %545 = vmatpush1.msra.mxu0 0.0
        %546 = vmatprep.subr.mxu0 0.0
        %547 = vmatpush1.msra.mxu0 0.0
        %548 = vmatprep.subr.mxu0 0.0
        %549 = vmatpush1.msra.mxu0 0.0
        %550 = vmatprep.subr.mxu0 0.0
        %551 = vmatpush1.msra.mxu0 0.0
        %552 = vmatprep.subr.mxu0 0.0
        %553 = vmatpush1.msra.mxu0 0.0
        %554 = vmatprep.subr.mxu0 0.0
        %555 = vmatpush1.msra.mxu0 0.0
        %556 = vmatprep.subr.mxu0 0.0
        %557 = vmatpush1.msra.mxu0 0.0
        %558 = vmatprep.subr.mxu0 0.0
        %559 = vmatpush1.msra.mxu0 0.0
        %560 = vmatprep.subr.mxu0 0.0
        %561 = vmatpush1.msra.mxu0 0.0
        %562 = vmatprep.subr.mxu0 0.0
        %563 = vmatpush1.msra.mxu0 0.0
        %564 = vmatprep.subr.mxu0 0.0
        %565 = vmatpush1.msra.mxu0 0.0
        %566 = vmatprep.subr.mxu0 0.0
        %567 = vmatpush1.msra.mxu0 0.0
        %568 = vmatprep.mubr.f32.mxu0 0.0
        %569 = vmatmul.mubr.f32.gmra.mrb[0].mxu0 %v481
        %v570 = vpop.f32.mrb[0].mxu0
        %v571 = vadd.f32 %v442, %v570
        %v572 = vpop.f32.mrb[0].mxu0
        %v573 = vadd.f32 %v442, %v572
        %574 = vmatprep.mubr.f32.mxu0 0.0
        %575 = vmatmul.mubr.f32.gmra.mrb[0].mxu0 %v484
        %v576 = vpop.f32.mrb[0].mxu0
        %v577 = vadd.f32 %v447, %v576
        %v578 = vpop.f32.mrb[0].mxu0
        %v579 = vadd.f32 %v447, %v578
        %580 = vmatprep.mubr.f32.mxu0 0.0
        %581 = vmatmul.mubr.f32.gmra.mrb[0].mxu0 %v487
        %v582 = vpop.f32.mrb[0].mxu0
        %v583 = vadd.f32 %v452, %v582
        %v584 = vpop.f32.mrb[0].mxu0
        %v585 = vadd.f32 %v452, %v584
        %586 = vmatprep.mubr.f32.mxu0 0.0
        %587 = vmatmul.mubr.f32.gmra.mrb[0].mxu0 %v490
        %v588 = vpop.f32.mrb[0].mxu0
        %v589 = vadd.f32 %v457, %v588
        %v590 = vpop.f32.mrb[0].mxu0
        %v591 = vadd.f32 %v457, %v590
        %592 = vmatprep.mubr.f32.mxu0 0.0
        %593 = vmatmul.mubr.f32.gmra.mrb[0].mxu0 %v493
        %v594 = vpop.f32.mrb[0].mxu0
        %v595 = vadd.f32 %v462, %v594
        %v596 = vpop.f32.mrb[0].mxu0
        %v597 = vadd.f32 %v462, %v596
        %598 = vmatprep.mubr.f32.mxu0 0.0
        %599 = vmatmul.mubr.f32.gmra.mrb[0].mxu0 %v496
        %v600 = vpop.f32.mrb[0].mxu0
        %v601 = vadd.f32 %v467, %v600
        %v602 = vpop.f32.mrb[0].mxu0
        %v603 = vadd.f32 %v467, %v602
        %604 = vmatprep.mubr.f32.mxu0 0.0
        %605 = vmatmul.mubr.f32.gmra.mrb[0].mxu0 %v499
        %v606 = vpop.f32.mrb[0].mxu0
        %v607 = vadd.f32 %v472, %v606
        %v608 = vpop.f32.mrb[0].mxu0
        %v609 = vadd.f32 %v472, %v608
        %610 = vmatprep.mubr.f32.mxu0 0.0
        %611 = vmatmul.mubr.f32.gmra.mrb[0].mxu0 %v502
        %v612 = vpop.f32.mrb[0].mxu0
        %v613 = vadd.f32 %v477, %v612
        %v614 = vpop.f32.mrb[0].mxu0
        %v615 = vadd.f32 %v477, %v614
        %616 = vdwg.mxu0
        %v617 = vmax.f32 %v571, 0.0
        %v618 = vmax.f32 %v573, 0.0
        %v619 = vmax.f32 %v577, 0.0
        %v620 = vmax.f32 %v579, 0.0
        %v621 = vmax.f32 %v583, 0.0
        %v622 = vmax.f32 %v585, 0.0
        %v623 = vmax.f32 %v589, 0.0
        %v624 = vmax.f32 %v591, 0.0
        %v625 = vmax.f32 %v595, 0.0
        %v626 = vmax.f32 %v597, 0.0
        %v627 = vmax.f32 %v601, 0.0
        %v628 = vmax.f32 %v603, 0.0
        %v629 = vmax.f32 %v607, 0.0
        %v630 = vmax.f32 %v609, 0.0
        %v631 = vmax.f32 %v613, 0.0
        %v632 = vmax.f32 %v615, 0.0
        %v633 = vld [vmem:[%s5] sm:$0xff]
        %v634 = vld [vmem:[%s5 + $0x8] sm:$0xff]
        %v635 = vld [vmem:[%s5 + $0x10] sm:$0xff]
        %v636 = vld [vmem:[%s5 + $0x18] sm:$0xff]
        %v637 = vld [vmem:[%s6] sm:$0xff]
        %v638 = vld [vmem:[%s6 + $0x8] sm:$0xff]
        %v639 = vld [vmem:[%s6 + $0x10] sm:$0xff]
        %v640 = vld [vmem:[%s6 + $0x18] sm:$0xff]
        %642 = vset.pattern.permute.xlu0 0
        %643 = vperm.xlu0 %642, %v637
        %v644 = vpop.permute.xlu0 %643
        %647 = vset.pattern.permute.xlu0 0
        %648 = vperm.xlu0 %647, %v638
        %v649 = vpop.permute.xlu0 %648
        %652 = vset.pattern.permute.xlu0 0
        %653 = vperm.xlu0 %652, %v639
        %v654 = vpop.permute.xlu0 %653
        %657 = vset.pattern.permute.xlu0 0
        %658 = vperm.xlu0 %657, %v640
        %v659 = vpop.permute.xlu0 %658
        %vm661 = vcmask 523264
        %v663 = vsel %vm661, %v633, 0
        %v666 = vsel %vm661, %v634, 0
        %v669 = vsel %vm661, %v635, 0
        %v672 = vsel %vm661, %v636, 0
        %674 = vmatprep.subr.mxu0 %v618
        %675 = vmatpush1.msra.mxu0 %v617
        %676 = vmatprep.subr.mxu0 %v620
        %677 = vmatpush1.msra.mxu0 %v619
        %678 = vmatprep.subr.mxu0 %v622
        %679 = vmatpush1.msra.mxu0 %v621
        %680 = vmatprep.subr.mxu0 %v624
        %681 = vmatpush1.msra.mxu0 %v623
        %682 = vmatprep.subr.mxu0 %v626
        %683 = vmatpush1.msra.mxu0 %v625
        %684 = vmatprep.subr.mxu0 %v628
        %685 = vmatpush1.msra.mxu0 %v627
        %686 = vmatprep.subr.mxu0 %v630
        %687 = vmatpush1.msra.mxu0 %v629
        %688 = vmatprep.subr.mxu0 %v632
        %689 = vmatpush1.msra.mxu0 %v631
        %690 = vmatprep.subr.mxu0 0.0
        %691 = vmatpush1.msra.mxu0 0.0
        %692 = vmatprep.subr.mxu0 0.0
        %693 = vmatpush1.msra.mxu0 0.0
        %694 = vmatprep.subr.mxu0 0.0
        %695 = vmatpush1.msra.mxu0 0.0
        %696 = vmatprep.subr.mxu0 0.0
        %697 = vmatpush1.msra.mxu0 0.0
        %698 = vmatprep.subr.mxu0 0.0
        %699 = vmatpush1.msra.mxu0 0.0
        %700 = vmatprep.subr.mxu0 0.0
        %701 = vmatpush1.msra.mxu0 0.0
        %702 = vmatprep.subr.mxu0 0.0
        %703 = vmatpush1.msra.mxu0 0.0
        %704 = vmatprep.subr.mxu0 0.0
        %705 = vmatpush1.msra.mxu0 0.0
        %706 = vmatprep.subr.mxu0 0.0
        %707 = vmatpush1.msra.mxu0 0.0
        %708 = vmatprep.subr.mxu0 0.0
        %709 = vmatpush1.msra.mxu0 0.0
        %710 = vmatprep.subr.mxu0 0.0
        %711 = vmatpush1.msra.mxu0 0.0
        %712 = vmatprep.subr.mxu0 0.0
        %713 = vmatpush1.msra.mxu0 0.0
        %714 = vmatprep.subr.mxu0 0.0
        %715 = vmatpush1.msra.mxu0 0.0
        %716 = vmatprep.subr.mxu0 0.0
        %717 = vmatpush1.msra.mxu0 0.0
        %718 = vmatprep.subr.mxu0 0.0
        %719 = vmatpush1.msra.mxu0 0.0
        %720 = vmatprep.subr.mxu0 0.0
        %721 = vmatpush1.msra.mxu0 0.0
        %722 = vmatprep.subr.mxu0 0.0
        %723 = vmatpush1.msra.mxu0 0.0
        %724 = vmatprep.subr.mxu0 0.0
        %725 = vmatpush1.msra.mxu0 0.0
        %726 = vmatprep.subr.mxu0 0.0
        %727 = vmatpush1.msra.mxu0 0.0
        %728 = vmatprep.subr.mxu0 0.0
        %729 = vmatpush1.msra.mxu0 0.0
        %730 = vmatprep.subr.mxu0 0.0
        %731 = vmatpush1.msra.mxu0 0.0
        %732 = vmatprep.subr.mxu0 0.0
        %733 = vmatpush1.msra.mxu0 0.0
        %734 = vmatprep.subr.mxu0 0.0
        %735 = vmatpush1.msra.mxu0 0.0
        %736 = vmatprep.subr.mxu0 0.0
        %737 = vmatpush1.msra.mxu0 0.0
        %738 = vmatprep.mubr.f32.mxu0 0.0
        %739 = vmatmul.mubr.f32.gmra.mrb[0].mxu0 %v663
        %v740 = vpop.f32.mrb[0].mxu0
        %v741 = vadd.f32 %v644, %v740
        %v742 = vpop.f32.mrb[0].mxu0
        %v743 = vadd.f32 %v644, %v742
        %744 = vmatprep.mubr.f32.mxu0 0.0
        %745 = vmatmul.mubr.f32.gmra.mrb[0].mxu0 %v666
        %v746 = vpop.f32.mrb[0].mxu0
        %v747 = vadd.f32 %v649, %v746
        %v748 = vpop.f32.mrb[0].mxu0
        %v749 = vadd.f32 %v649, %v748
        %750 = vmatprep.mubr.f32.mxu0 0.0
        %751 = vmatmul.mubr.f32.gmra.mrb[0].mxu0 %v669
        %v752 = vpop.f32.mrb[0].mxu0
        %v753 = vadd.f32 %v654, %v752
        %v754 = vpop.f32.mrb[0].mxu0
        %v755 = vadd.f32 %v654, %v754
        %756 = vmatprep.mubr.f32.mxu0 0.0
        %757 = vmatmul.mubr.f32.gmra.mrb[0].mxu0 %v672
        %v758 = vpop.f32.mrb[0].mxu0
        %v759 = vadd.f32 %v659, %v758
        %v760 = vpop.f32.mrb[0].mxu0
        %v761 = vadd.f32 %v659, %v760
        %762 = vdwg.mxu0
        %763 = vst [vmem:[%s271] sm:$0xff] %v741
        %764 = vst [vmem:[%s271 + $0x8] sm:$0xff] %v743
        %765 = vst [vmem:[%s271 + $0x10] sm:$0xff] %v747
        %766 = vst [vmem:[%s271 + $0x18] sm:$0xff] %v749
        %767 = vst [vmem:[%s271 + $0x20] sm:$0xff] %v753
        %768 = vst [vmem:[%s271 + $0x28] sm:$0xff] %v755
        %769 = vst [vmem:[%s271 + $0x30] sm:$0xff] %v759
        %770 = vst [vmem:[%s271 + $0x38] sm:$0xff] %v761
        %s771 = sand.u32 %s181, 1
        %s772 = scalar_lea.sflag [#allocation3], %s771
        %s773 = sand.u32 %s181, 1
        %s774 = smul.addr %s773, 64
        %s775 = scalar_lea.vmem [#allocation2], %s774
        // Predicated region
        $region49: #{tpu_custom_call.1} parent=47 // pred_check
          %p776 = pneg %p191
        $region50: #{tpu_custom_call.1} parent=47 // pred_check_branch
          %778 = sbr.rel (%p776) target = $region52
        $region51: #{tpu_custom_call.1} parent=47 // pred_region
          %s780 = ssub.s32 1024, 1024
          %781 = vsyncadd %s772, %s780
          %s782 = smul.addr %s21, 8
          %s783 = smul.addr %s782, 128
          %s784 = scalar_lea.hbm %s7, %s783
          %s785 = sshll.u32 %s775, 4
          %s786 = int_to_ptr.vmem [resolvable:$true] %s785
          %791 = dma.vmem_to_hbm [thread:$0]  %s786, 1024, %s784, %s772, 256, 256, 16
        $region52: #{tpu_custom_call.1} parent=47 // pred_fallthru
          _
      $region48: #{tpu_custom_call.1} parent=5 // pred_fallthru
        _
      %p792 = scmp.le.s32.totalorder 2, %s16
      // Predicated region
      $region53: #{tpu_custom_call.1} parent=5 // pred_check
        %p793 = pneg %p792
      $region54: #{tpu_custom_call.1} parent=5 // pred_check_branch
        %795 = sbr.rel (%p793) target = $region56
      $region55: #{tpu_custom_call.1} parent=5 // pred_region
        %s796 = ssub.s32 %s16, 2
        // Predicated region
        $region57: #{tpu_custom_call.1} parent=55 // pred_check
          %p797 = pneg %p197
        $region58: #{tpu_custom_call.1} parent=55 // pred_check_branch
          %799 = sbr.rel (%p797) target = $region60
        $region59: #{tpu_custom_call.1} parent=55 // pred_region
          %s800 = sand.u32 %s182, 1
          %s801 = scalar_lea.sflag [#allocation3], %s800
          %s802 = sand.u32 %s182, 1
          %s803 = smul.addr %s802, 64
          %s804 = scalar_lea.vmem [#allocation2], %s803
          %805 = dma.done %s801, 1024
        $region60: #{tpu_custom_call.1} parent=55 // pred_fallthru
          _
      $region56: #{tpu_custom_call.1} parent=5 // pred_fallthru
        _
    $region6: #{tpu_custom_call.1} parent=1 // loop_footer
      %s20 = sadd.s32 1, %s16
    $region7: #{tpu_custom_call.1} parent=1 // loop_footer_branch
      %15 = sbr.rel target = $region3
    $region8: #{tpu_custom_call.1} parent=1 // loop_exit
      _
    %806 = vsyncpa [#allocation3], 1
    %s807 = scalar_lea.sflag [#allocation3], 1
    %808 = vsyncpa %s807, 1

</llo_original>
